<compile_context>
chip_gen: v6e
topology: v6e:2x2x1
jax: 0.10.0
libtpu: 0.0.40
codegen_flags: <defaults>
</compile_context>

<pallas_src>
import functools

import jax
import jax.numpy as jnp
from jax.experimental import pallas as pl
from jax.experimental.pallas import tpu as pltpu


def _round_up(x, m):
    return (x + m - 1) // m * m


# ----------------------------------------------------------------------------
# Pallas kernel: SNSE-PBC filter on TB frames at once (frames on the lane axis).
# ----------------------------------------------------------------------------
def _snse_kernel(Nmodes, a_ref, p_ref, x_ref, y_ref):
    # a_ref : [2*L, L] bf16      stacked circulant taps [A_real ; A_imag]
    # p_ref : [1, 1, TB] f32     per-frame launch power
    # x_ref : [1, 2*Nmodes, L, TB] f32  planes [re(m0..), im(m0..)]
    # y_ref : [1, 2*Nmodes, L, TB] f32
    L = a_ref.shape[1]
    cm = 2 * Nmodes

    # total intensity over both pols, accumulated plane-by-plane so no full
    # block stays live across the matmul.
    x0 = x_ref[0, 0]
    inten = x0 * x0                                     # [L, TB]
    for c in range(1, cm):
        xc = x_ref[0, c]
        inten = inten + xc * xc

    # ONE fused MXU matmul: [2L, L] @ [L, TB] -> [phi_r ; phi_i], bf16 operands,
    # f32 accumulation.
    phi = jnp.dot(a_ref[...], inten.astype(jnp.bfloat16),
                  preferred_element_type=jnp.float32)   # [2L, TB]

    p = p_ref[0]                                        # [1, TB] broadcast over bins
    gr = p * phi[:L]                                    # [L, TB]
    gi = p * phi[L:]
    one_gr = 1.0 + gr

    # y = x * (1 + gr + i*gi); per-plane reads and per-plane stores so the
    # store slot is fed while the VPU is still working (single vst slot on v5e).
    for m in range(Nmodes):
        xr = x_ref[0, m]
        xi = x_ref[0, Nmodes + m]
        y_ref[0, m] = xr * one_gr - xi * gi
        y_ref[0, Nmodes + m] = xi * one_gr + xr * gi


def snse_filter_pallas(A2, p3, xs, *, Nmodes, TB, vmem_limit):
    """A2: [2L, L] bf16, p3: [batch, 1, Spad] f32, xs: [batch, 2*Nmodes, L, Spad] f32."""
    batch, cm, L, Spad = xs.shape
    assert cm == 2 * Nmodes and Spad % TB == 0 and TB % 128 == 0
    nblk = Spad // TB
    kernel = functools.partial(_snse_kernel, Nmodes)
    return pl.pallas_call(
        kernel,
        grid=(batch, nblk),
        in_specs=[
            pl.BlockSpec((2 * L, L), lambda b, s: (0, 0)),            # taps (resident)
            pl.BlockSpec((1, 1, TB), lambda b, s: (b, 0, s)),         # power
            pl.BlockSpec((1, cm, L, TB), lambda b, s: (b, 0, 0, s)),  # spectra
        ],
        out_specs=pl.BlockSpec((1, cm, L, TB), lambda b, s: (b, 0, 0, s)),
        out_shape=jax.ShapeDtypeStruct(xs.shape, jnp.float32),
        compiler_params=pltpu.CompilerParams(
            dimension_semantics=("parallel", "parallel"),
            vmem_limit_bytes=int(vmem_limit)),
    )(A2, p3, xs)


# ----------------------------------------------------------------------------
# VMEM-budgeted lane-block (TB) choice -- per TPU generation.
# ----------------------------------------------------------------------------
def _vmem_plan(L, Nmodes, steps, lane_block=None):
    cm = 2 * Nmodes
    try:
        cap = int(pltpu.get_tpu_info().vmem_capacity_bytes)
    except Exception:
        cap = 64 << 20                      # v7x (smallest VMEM) as safe fallback
    budget = cap // 2                       # headroom for compiler internals
    tap_bytes = 2 * (2 * 2 * L * L)         # bf16 [2L, L], pipeline double-buffers it
    # per-lane bytes: double-buffered f32 x + y blocks + power, plus in-kernel
    # temporaries (phi [2L], inten, bf16 copy, products).
    per_lane = 2 * (4 * cm * L + 4 * cm * L + 4) + (8 * L + 4 * L + 2 * L + 8 * L)
    if lane_block is None:
        tb = (budget - tap_bytes) // max(per_lane, 1)
        tb = max(128, min(4096, (tb // 128) * 128))
        tb = min(tb, max(128, _round_up(steps, 128)))   # never larger than needed
    else:
        tb = max(128, _round_up(lane_block, 128))
    usage = tap_bytes + per_lane * tb + (1 << 20)
    vmem_limit = int(min(cap * 3 // 4, max(32 << 20, usage)))
    return tb, vmem_limit


# ----------------------------------------------------------------------------
# Circulant tap matrix: phi[n] = sum_k C[k] * inten[(n + k - M//2) mod L]
#                              = sum_m A[n, m] * inten[m]
# (exactly the "periodic_padding + M valid windows" of the original module).
# Stacked [A_real ; A_imag] -> one fused matmul; bf16 for the MXU.
# ----------------------------------------------------------------------------
def _build_circulant_taps(cr, ci, L, M):
    hM = M // 2
    n = jnp.arange(L)[:, None]
    m = jnp.arange(L)[None, :]
    k0 = (m - n + hM) % L
    Ar = jnp.zeros((L, L), jnp.float32)
    Ai = jnp.zeros((L, L), jnp.float32)
    for t in range((M + L - 1) // L):                   # handles M > L too
        k = k0 + t * L
        valid = k < M
        kc = jnp.clip(k, 0, M - 1)
        Ar = Ar + jnp.where(valid, cr[kc], 0.0)
        Ai = Ai + jnp.where(valid, ci[kc], 0.0)
    return jnp.concatenate([Ar, Ai], axis=0).astype(jnp.bfloat16)   # [2L, L]


def _get_power(task_info, Nmodes):
    # TODO(synk): exact pkufiber get_power scaling (dBm -> linear, per mode).
    return (10.0 ** (task_info[:, 0] / 10.0) / Nmodes).astype(jnp.float32)


# ----------------------------------------------------------------------------
# Full EqStftSnsePBC forward (Pallas hot path).
# ----------------------------------------------------------------------------
def eq_stft_snse_pbc_forward(x, task_info, *, M, overlaps, strides, cr, ci,
                             lane_block=None):
    """x: [batch, L, Nmodes] complex64, task_info: [batch, 4]
       -> [batch, L - overlaps, Nmodes] complex64."""
    batch, L, Nmodes = x.shape
    n_fft = overlaps + strides
    hop = strides if strides > 0 else overlaps // 2
    steps = (L - n_fft) // hop + 1

    P = _get_power(task_info, Nmodes)                                   # [batch]

    # ---- STFT with the frame axis already minor (kills pre-kernel transposes)
    x_t = jnp.transpose(x, (0, 2, 1))                                   # [batch, Nmodes, L]
    idxT = jnp.arange(n_fft)[:, None] + jnp.arange(steps)[None, :] * hop  # [n_fft, steps]
    frames = x_t[:, :, idxT]                                            # [batch, Nmodes, n_fft, steps]
    X = jnp.fft.fft(frames, axis=2)                                     # spectra, frames minor

    # pack = real/imag split only (already lane-major in the frame axis)
    xs = jnp.concatenate([jnp.real(X), jnp.imag(X)], axis=1).astype(jnp.float32)
    # xs: [batch, 2*Nmodes, n_fft, steps]

    # task_info.repeat(steps, 1) semantics of the torch code: flat frame
    # i = b*steps + s (batch-major flatten) uses task_info[i % batch].
    b_idx = jnp.arange(batch)[:, None]
    s_idx = jnp.arange(steps)[None, :]
    P_frame = P[(b_idx * steps + s_idx) % batch]                        # [batch, steps]

    # ---- TB from per-generation VMEM budget; >=2 parallel grid points if possible
    TB, vmem_limit = _vmem_plan(n_fft, Nmodes, steps, lane_block)
    if batch * pl.cdiv(steps, TB) < 2 and TB >= 256:
        TB = max(128, (TB // 2) // 128 * 128)
    Spad = _round_up(max(steps, TB), TB)

    xs = jnp.pad(xs, ((0, 0), (0, 0), (0, 0), (0, Spad - steps)))
    p3 = jnp.pad(P_frame, ((0, 0), (0, Spad - steps))).reshape(batch, 1, Spad)
    A2 = _build_circulant_taps(cr, ci, n_fft, M)                        # [2*n_fft, n_fft] bf16

    # ---- Pallas hot path ----
    ys = snse_filter_pallas(A2, p3, xs, Nmodes=Nmodes, TB=TB, vmem_limit=vmem_limit)

    # ---- unpack = complex re-assembly only ----
    ys = ys[:, :, :, :steps]
    Y = (ys[:, :Nmodes] + 1j * ys[:, Nmodes:]).astype(jnp.complex64)    # [batch, Nmodes, n_fft, steps]

    # ---- ISTFT (overlap-add) in the channel-major layout, one transpose back
    frames_t = jnp.fft.ifft(Y, axis=2)                                  # [batch, Nmodes, n_fft, steps]
    flat_idx = idxT.reshape(-1)
    out = jnp.zeros((batch, Nmodes, L), frames_t.dtype)
    out = out.at[:, :, flat_idx].add(frames_t.reshape(batch, Nmodes, -1))
    norm = jnp.zeros((L,), jnp.float32).at[flat_idx].add(1.0)
    y = out / jnp.maximum(norm, 1e-12)[None, None, :]
    y = jnp.transpose(y, (0, 2, 1))                                     # [batch, L, Nmodes]
    return y[:, overlaps // 2: L - overlaps // 2, :]


# ----------------------------------------------------------------------------
# Pure-JAX reference (mirrors the original torch formulation directly, f32).
# ----------------------------------------------------------------------------
def _stft_frames(x, n_fft, hop):
    batch, L, Nmodes = x.shape
    steps = (L - n_fft) // hop + 1
    idx = jnp.arange(steps)[:, None] * hop + jnp.arange(n_fft)[None, :]
    frames = x[:, idx, :]
    return jnp.fft.fft(frames, axis=2), idx, steps


def _istft_overlap_add(Y, idx, length):
    batch, steps, n_fft, Nmodes = Y.shape
    frames = jnp.fft.ifft(Y, axis=2)
    flat_idx = idx.reshape(-1)
    out = jnp.zeros((batch, length, Nmodes), frames.dtype)
    out = out.at[:, flat_idx, :].add(frames.reshape(batch, -1, Nmodes))
    norm = jnp.zeros((length,), jnp.float32).at[flat_idx].add(1.0)
    return out / jnp.maximum(norm, 1e-12)[None, :, None]


def eq_stft_snse_pbc_reference(x, task_info, *, M, overlaps, strides, cr, ci):
    batch, L, Nmodes = x.shape
    n_fft = overlaps + strides
    hop = strides if strides > 0 else overlaps // 2
    P = _get_power(task_info, Nmodes)
    X, idx, steps = _stft_frames(x, n_fft, hop)
    Bp = batch * steps
    Xf = X.reshape(Bp, n_fft, Nmodes)
    P_flat = P[jnp.arange(Bp) % batch]

    hM = M // 2
    C = (cr + 1j * ci).astype(jnp.complex64)
    if hM > 0:
        Xpad = jnp.concatenate([Xf[:, -hM:, :], Xf, Xf[:, :hM, :]], axis=1)
    else:
        Xpad = Xf
    inten = jnp.sum(jnp.real(Xpad) ** 2 + jnp.imag(Xpad) ** 2, axis=-1)  # [Bp, Lp]
    phi = jnp.zeros((Bp, n_fft), jnp.complex64)
    for k in range(M):
        phi = phi + C[k] * inten[:, k:k + n_fft]
    Yf = Xf * (1.0 + P_flat[:, None] * phi)[:, :, None]
    Y = Yf.reshape(batch, steps, n_fft, Nmodes)
    y = _istft_overlap_add(Y, idx, L)
    return y[:, overlaps // 2: L - overlaps // 2, :]


# ----------------------------------------------------------------------------
if __name__ == "__main__":
    # Small shapes consistent with the module (overlaps even, M odd).
    M = 5
    overlaps = 8
    strides = 8
    n_fft = overlaps + strides
    hop = strides
    batch, Nmodes = 2, 2
    steps = 6
    L = n_fft + (steps - 1) * hop                      # 56 -> output length 48

    key = jax.random.PRNGKey(0)
    k1, k2 = jax.random.split(key, 2)
    x = (jax.random.normal(k1, (batch, L, Nmodes), jnp.float32)
         + 1j * jax.random.normal(k2, (batch, L, Nmodes), jnp.float32)).astype(jnp.complex64)
    # task_info columns: [P_dBm, Fi, Fs, Nch]
    task_info = jnp.stack(
        [jnp.array([0.0, 2.0], jnp.float32),
         jnp.zeros(batch, jnp.float32),
         jnp.zeros(batch, jnp.float32),
         jnp.zeros(batch, jnp.float32)], axis=1)

    # Deterministic complex filter taps (shared across polarizations, share=True).
    karr = jnp.arange(M, dtype=jnp.float32)
    decay = 1.0 / (1.0 + jnp.abs(karr - M // 2))
    cr = (0.01 * jnp.cos(0.3 * karr) * decay).astype(jnp.float32)
    ci = (0.01 * jnp.sin(0.3 * karr) * decay).astype(jnp.float32)

    y = eq_stft_snse_pbc_forward(x, task_info, M=M, overlaps=overlaps,
                                 strides=strides, cr=cr, ci=ci)
    y = jax.block_until_ready(y)
    y_ref = eq_stft_snse_pbc_reference(x, task_info, M=M, overlaps=overlaps,
                                       strides=strides, cr=cr, ci=ci)
    y_ref = jax.block_until_ready(y_ref)

    assert y.shape == (batch, L - overlaps, Nmodes), y.shape
    assert y.dtype == jnp.complex64
    assert bool(jnp.all(jnp.isfinite(jnp.abs(y))))

    err = float(jnp.max(jnp.abs(y - y_ref)))
    scale = float(jnp.max(jnp.abs(y_ref)))
    # Tolerance: bf16 taps/intensity give ~4e-3 relative error in the phase
    # correction; layout / indexing / tap-alignment bugs give O(0.1..1) errors.
    assert err <= 2e-2 * max(scale, 1.0), (err, scale)
    print("KERNEL_OK")
</pallas_src>

<mosaic_0001>
module attributes {stable_mosaic.version = 11 : i64} {
  func.func @_snse_kernel(%arg0: i32, %arg1: i32, %arg2: memref<32x16xbf16, #tpu.memory_space<vmem>>, %arg3: memref<1x1x128xf32, #tpu.memory_space<vmem>>, %arg4: memref<1x4x16x128xf32, #tpu.memory_space<vmem>>, %arg5: memref<1x4x16x128xf32, #tpu.memory_space<vmem>>) attributes {dimension_semantics = [#tpu.dimension_semantics<parallel>, #tpu.dimension_semantics<parallel>], iteration_bounds = array<i64: 2, 1>, scalar_prefetch = 0 : i64, scratch_operands = 0 : i64, tpu.core_type = #tpu.core_type<tc>, window_params = [{pipeline_mode = #tpu.pipeline_mode<synchronous>, transform_indices = @transform_0, window_bounds = array<i64: 32, 16>}, {transform_indices = @transform_1, window_bounds = array<i64: 1, 1, 128>}, {transform_indices = @transform_2, window_bounds = array<i64: 1, 4, 16, 128>}, {transform_indices = @transform_3, window_bounds = array<i64: 1, 4, 16, 128>}]} {
    %c0 = arith.constant 0 : index
    %c0_0 = arith.constant 0 : index
    %c0_1 = arith.constant 0 : index
    %c0_2 = arith.constant 0 : index
    %0 = vector.load %arg4[%c0, %c0_0, %c0_1, %c0_2] : memref<1x4x16x128xf32, #tpu.memory_space<vmem>>, vector<1x1x16x128xf32>
    %1 = vector.shape_cast %0 : vector<1x1x16x128xf32> to vector<16x128xf32>
    %2 = arith.mulf %1, %1 : vector<16x128xf32>
    %c0_3 = arith.constant 0 : index
    %c1 = arith.constant 1 : index
    %c0_4 = arith.constant 0 : index
    %c0_5 = arith.constant 0 : index
    %3 = vector.load %arg4[%c0_3, %c1, %c0_4, %c0_5] : memref<1x4x16x128xf32, #tpu.memory_space<vmem>>, vector<1x1x16x128xf32>
    %4 = vector.shape_cast %3 : vector<1x1x16x128xf32> to vector<16x128xf32>
    %5 = arith.mulf %4, %4 : vector<16x128xf32>
    %6 = arith.addf %2, %5 : vector<16x128xf32>
    %c0_6 = arith.constant 0 : index
    %c2 = arith.constant 2 : index
    %c0_7 = arith.constant 0 : index
    %c0_8 = arith.constant 0 : index
    %7 = vector.load %arg4[%c0_6, %c2, %c0_7, %c0_8] : memref<1x4x16x128xf32, #tpu.memory_space<vmem>>, vector<1x1x16x128xf32>
    %8 = vector.shape_cast %7 : vector<1x1x16x128xf32> to vector<16x128xf32>
    %9 = arith.mulf %8, %8 : vector<16x128xf32>
    %10 = arith.addf %6, %9 : vector<16x128xf32>
    %c0_9 = arith.constant 0 : index
    %c3 = arith.constant 3 : index
    %c0_10 = arith.constant 0 : index
    %c0_11 = arith.constant 0 : index
    %11 = vector.load %arg4[%c0_9, %c3, %c0_10, %c0_11] : memref<1x4x16x128xf32, #tpu.memory_space<vmem>>, vector<1x1x16x128xf32>
    %12 = vector.shape_cast %11 : vector<1x1x16x128xf32> to vector<16x128xf32>
    %13 = arith.mulf %12, %12 : vector<16x128xf32>
    %14 = arith.addf %10, %13 : vector<16x128xf32>
    %c0_12 = arith.constant 0 : index
    %c0_13 = arith.constant 0 : index
    %15 = vector.load %arg2[%c0_12, %c0_13] : memref<32x16xbf16, #tpu.memory_space<vmem>>, vector<32x16xbf16>
    %16 = arith.truncf %14 : vector<16x128xf32> to vector<16x128xbf16>
    %cst = arith.constant dense<0.000000e+00> : vector<32x128xf32>
    %17 = tpu.matmul %15, %16, %cst {dimension_numbers = #tpu.dot_dimension_numbers<[1], [0], [0], [1], [0, 0, 1, 1], [], []>} : vector<32x16xbf16>, vector<16x128xbf16>, vector<32x128xf32> -> vector<32x128xf32>
    %c0_14 = arith.constant 0 : index
    %c0_15 = arith.constant 0 : index
    %c0_16 = arith.constant 0 : index
    %18 = vector.load %arg3[%c0_14, %c0_15, %c0_16] : memref<1x1x128xf32, #tpu.memory_space<vmem>>, vector<1x1x128xf32>
    %19 = vector.shape_cast %18 : vector<1x1x128xf32> to vector<1x128xf32>
    %20 = vector.extract_strided_slice %17 {offsets = [0, 0], sizes = [16, 128], strides = [1, 1]} : vector<32x128xf32> to vector<16x128xf32>
    %21 = vector.broadcast %19 : vector<1x128xf32> to vector<16x128xf32>
    %22 = arith.mulf %21, %20 : vector<16x128xf32>
    %23 = vector.extract_strided_slice %17 {offsets = [16, 0], sizes = [16, 128], strides = [1, 1]} : vector<32x128xf32> to vector<16x128xf32>
    %24 = vector.broadcast %19 : vector<1x128xf32> to vector<16x128xf32>
    %25 = arith.mulf %24, %23 : vector<16x128xf32>
    %cst_17 = arith.constant 1.000000e+00 : f32
    %26 = vector.broadcast %cst_17 : f32 to vector<16x128xf32>
    %27 = arith.addf %26, %22 : vector<16x128xf32>
    %c0_18 = arith.constant 0 : index
    %c0_19 = arith.constant 0 : index
    %c0_20 = arith.constant 0 : index
    %c0_21 = arith.constant 0 : index
    %28 = vector.load %arg4[%c0_18, %c0_19, %c0_20, %c0_21] : memref<1x4x16x128xf32, #tpu.memory_space<vmem>>, vector<1x1x16x128xf32>
    %29 = vector.shape_cast %28 : vector<1x1x16x128xf32> to vector<16x128xf32>
    %c0_22 = arith.constant 0 : index
    %c2_23 = arith.constant 2 : index
    %c0_24 = arith.constant 0 : index
    %c0_25 = arith.constant 0 : index
    %30 = vector.load %arg4[%c0_22, %c2_23, %c0_24, %c0_25] : memref<1x4x16x128xf32, #tpu.memory_space<vmem>>, vector<1x1x16x128xf32>
    %31 = vector.shape_cast %30 : vector<1x1x16x128xf32> to vector<16x128xf32>
    %32 = arith.mulf %29, %27 : vector<16x128xf32>
    %33 = arith.mulf %31, %25 : vector<16x128xf32>
    %34 = arith.subf %32, %33 : vector<16x128xf32>
    %c0_26 = arith.constant 0 : index
    %c0_27 = arith.constant 0 : index
    %c0_28 = arith.constant 0 : index
    %c0_29 = arith.constant 0 : index
    %35 = vector.load %arg5[%c0_26, %c0_27, %c0_28, %c0_29] : memref<1x4x16x128xf32, #tpu.memory_space<vmem>>, vector<1x1x16x128xf32>
    %36 = vector.shape_cast %35 : vector<1x1x16x128xf32> to vector<16x128xf32>
    %37 = vector.shape_cast %34 : vector<16x128xf32> to vector<1x1x16x128xf32>
    tpu.vector_store %arg5[%c0_26, %c0_27, %c0_28, %c0_29], %37 {strides = array<i32>} : memref<1x4x16x128xf32, #tpu.memory_space<vmem>>, vector<1x1x16x128xf32>,
    %38 = arith.mulf %31, %27 : vector<16x128xf32>
    %39 = arith.mulf %29, %25 : vector<16x128xf32>
    %40 = arith.addf %38, %39 : vector<16x128xf32>
    %c0_30 = arith.constant 0 : index
    %c2_31 = arith.constant 2 : index
    %c0_32 = arith.constant 0 : index
    %c0_33 = arith.constant 0 : index
    %41 = vector.load %arg5[%c0_30, %c2_31, %c0_32, %c0_33] : memref<1x4x16x128xf32, #tpu.memory_space<vmem>>, vector<1x1x16x128xf32>
    %42 = vector.shape_cast %41 : vector<1x1x16x128xf32> to vector<16x128xf32>
    %43 = vector.shape_cast %40 : vector<16x128xf32> to vector<1x1x16x128xf32>
    tpu.vector_store %arg5[%c0_30, %c2_31, %c0_32, %c0_33], %43 {strides = array<i32>} : memref<1x4x16x128xf32, #tpu.memory_space<vmem>>, vector<1x1x16x128xf32>,
    %c0_34 = arith.constant 0 : index
    %c1_35 = arith.constant 1 : index
    %c0_36 = arith.constant 0 : index
    %c0_37 = arith.constant 0 : index
    %44 = vector.load %arg4[%c0_34, %c1_35, %c0_36, %c0_37] : memref<1x4x16x128xf32, #tpu.memory_space<vmem>>, vector<1x1x16x128xf32>
    %45 = vector.shape_cast %44 : vector<1x1x16x128xf32> to vector<16x128xf32>
    %c0_38 = arith.constant 0 : index
    %c3_39 = arith.constant 3 : index
    %c0_40 = arith.constant 0 : index
    %c0_41 = arith.constant 0 : index
    %46 = vector.load %arg4[%c0_38, %c3_39, %c0_40, %c0_41] : memref<1x4x16x128xf32, #tpu.memory_space<vmem>>, vector<1x1x16x128xf32>
    %47 = vector.shape_cast %46 : vector<1x1x16x128xf32> to vector<16x128xf32>
    %48 = arith.mulf %45, %27 : vector<16x128xf32>
    %49 = arith.mulf %47, %25 : vector<16x128xf32>
    %50 = arith.subf %48, %49 : vector<16x128xf32>
    %c0_42 = arith.constant 0 : index
    %c1_43 = arith.constant 1 : index
    %c0_44 = arith.constant 0 : index
    %c0_45 = arith.constant 0 : index
    %51 = vector.load %arg5[%c0_42, %c1_43, %c0_44, %c0_45] : memref<1x4x16x128xf32, #tpu.memory_space<vmem>>, vector<1x1x16x128xf32>
    %52 = vector.shape_cast %51 : vector<1x1x16x128xf32> to vector<16x128xf32>
    %53 = vector.shape_cast %50 : vector<16x128xf32> to vector<1x1x16x128xf32>
    tpu.vector_store %arg5[%c0_42, %c1_43, %c0_44, %c0_45], %53 {strides = array<i32>} : memref<1x4x16x128xf32, #tpu.memory_space<vmem>>, vector<1x1x16x128xf32>,
    %54 = arith.mulf %47, %27 : vector<16x128xf32>
    %55 = arith.mulf %45, %25 : vector<16x128xf32>
    %56 = arith.addf %54, %55 : vector<16x128xf32>
    %c0_46 = arith.constant 0 : index
    %c3_47 = arith.constant 3 : index
    %c0_48 = arith.constant 0 : index
    %c0_49 = arith.constant 0 : index
    %57 = vector.load %arg5[%c0_46, %c3_47, %c0_48, %c0_49] : memref<1x4x16x128xf32, #tpu.memory_space<vmem>>, vector<1x1x16x128xf32>
    %58 = vector.shape_cast %57 : vector<1x1x16x128xf32> to vector<16x128xf32>
    %59 = vector.shape_cast %56 : vector<16x128xf32> to vector<1x1x16x128xf32>
    tpu.vector_store %arg5[%c0_46, %c3_47, %c0_48, %c0_49], %59 {strides = array<i32>} : memref<1x4x16x128xf32, #tpu.memory_space<vmem>>, vector<1x1x16x128xf32>,
    return
  }
  func.func @transform_0(%arg0: i32, %arg1: i32) -> (i32, i32) {
    %c0_i32 = arith.constant 0 : i32
    %c0_i32_0 = arith.constant 0 : i32
    %c0_i32_1 = arith.constant 0 : i32
    return %c0_i32, %c0_i32_0 : i32, i32
  }
  func.func @transform_1(%arg0: i32, %arg1: i32) -> (i32, i32, i32) {
    %c0_i32 = arith.constant 0 : i32
    %c0_i32_0 = arith.constant 0 : i32
    return %arg0, %c0_i32, %arg1 : i32, i32, i32
  }
  func.func @transform_2(%arg0: i32, %arg1: i32) -> (i32, i32, i32, i32) {
    %c0_i32 = arith.constant 0 : i32
    %c0_i32_0 = arith.constant 0 : i32
    %c0_i32_1 = arith.constant 0 : i32
    return %arg0, %c0_i32, %c0_i32_0, %arg1 : i32, i32, i32, i32
  }
  func.func @transform_3(%arg0: i32, %arg1: i32) -> (i32, i32, i32, i32) {
    %c0_i32 = arith.constant 0 : i32
    %c0_i32_0 = arith.constant 0 : i32
    %c0_i32_1 = arith.constant 0 : i32
    return %arg0, %c0_i32, %c0_i32_0, %arg1 : i32, i32, i32, i32
  }
}

</mosaic_0001>

<llo_original>
// kernel: tpu_custom_call.1
$region0: #{tpu_custom_call.1}
  #allocation0 [shape = 'u32[]', space=smem, size = 0x4, offset = 0x4, fixed_abs, tag = 'smem constant byte address 0x4 - core index']
  #allocation1 [shape = 'u32[144,128]{1,0:T(1,128)}', space=vmem, size = 0x12000, scoped, tag = 'internal scratch']
  %s0 = inlined_call_operand.vmem [shape: bf16[32,16], index: 0, kind: input, shape index: {}]
  %s1 = inlined_call_operand.vmem [shape: f32[2,1,128], index: 1, kind: input, shape index: {}]
  %s2 = inlined_call_operand.hbm [shape: f32[2,4,16,128], index: 2, kind: input, shape index: {}]
  %s3 = inlined_call_operand.hbm [shape: f32[2,4,16,128], index: 3, kind: output, shape index: {}]
  %s4 = sld [smem:[#allocation0]]
  $region49: #{tpu_custom_call.1} parent=0
    _
  %s6 = ssub.s32 1, %s4
  %s7 = scalar_select 0, %s6, %s4
  $region1: #{tpu_custom_call.1} parent=0
    #allocation2 [shape = 'u8[65536]{0}', space=vmem, size = 0x10000, scoped, tag = 'input window, operand 2']
    #allocation3 [shape = 's32[2]{0}', space=sflag, size = 0x8, scoped, tag = 'scoped memory for tpu_custom_call.1']
    #allocation4 [shape = 's32[2]{0}', space=sflag, size = 0x8, scoped, tag = 'scoped memory for tpu_custom_call.1']
    #allocation5 [shape = 'u8[65536]{0}', space=vmem, size = 0x10000, scoped, tag = 'output window, operand 0']
    %8 = vsyncpa [#allocation3], 0
    %s9 = scalar_lea.sflag [#allocation3], 1
    %10 = vsyncpa %s9, 0
    %11 = vsyncpa [#allocation4], 0
    %s12 = scalar_lea.sflag [#allocation4], 1
    %13 = vsyncpa %s12, 0
    loop: start=0, step=1, limit=4
    $region2: #{tpu_custom_call.1} parent=1 // loop_pre_header
      _
    $region3: #{tpu_custom_call.1} parent=1 // loop_header
      %s15 = sphi 0, %s19
      %p16 = scmp.ge.s32.totalorder %s15, 4
      %s22 = sphi 0, %s34
      %s23 = sphi 0, %s30
      %s24 = sphi 0, %s22
      %s25 = sphi 0, %s23
      %s26 = sphi 0, %s24
      %s27 = sphi 0, %s25
      %s35 = sphi 0, %s35
      %s37 = sphi 0, %s35
      %s38 = sphi 0, %s37
      %s52 = sphi 0, %s38
      %s60 = sphi 0, %s62
      %s63 = sphi 0, %s60
      %s64 = sphi 0, %s63
      %s80 = sphi 0, %s64
      %s88 = sphi 0, %s90
      %s91 = sphi 0, %s88
      %s92 = sphi 0, %s91
      %s108 = sphi 0, %s92
      %s116 = sphi 0, %s118
      %s119 = sphi 0, %s116
      %s120 = sphi 0, %s119
      %s136 = sphi 0, %s120
    $region4: #{tpu_custom_call.1} parent=1 // loop_header_branch
      %18 = sbr.rel (%p16) target = $region8
    $region5: #{tpu_custom_call.1} parent=1 // loop_body
      %s20 = ssub.s32 %s15, 1
      %s21 = ssub.s32 %s15, 2
      %s28 = sadd.s32 1, %s23
      %p29 = scmp.ge.s32.totalorder %s28, 1
      %s30 = scalar_select %p29, 0, %s28
      %s31 = sadd.s32 1, %s22
      %s32 = scalar_select %p29, %s31, %s22
      %p33 = scmp.ge.s32.totalorder %s32, 2
      %s34 = scalar_select %p33, 0, %s32
      %s36 = sadd.s32 %s35, 1
      %p39 = scmp.eq.s32.totalorder %s15, 1
      %p40 = scmp.ne.s32.totalorder %s35, %s37
      %p41 = scmp.eq.s32.totalorder %s15, 0
      %p42 = por %p40, %p41
      %p43 = scmp.ne.s32.totalorder %s35, %s37
      %p44 = scmp.eq.s32.totalorder %s20, 1
      %p45 = por %p43, %p44
      %p46 = scmp.ne.s32.totalorder %s37, %s38
      %p47 = scmp.eq.s32.totalorder %s20, 0
      %p48 = por %p46, %p47
      %p49 = scmp.ne.s32.totalorder %s37, %s38
      %p50 = scmp.eq.s32.totalorder %s21, 1
      %p51 = por %p49, %p50
      %p53 = scmp.ne.s32.totalorder %s38, %s52
      %p54 = scmp.eq.s32.totalorder %s21, 0
      %p55 = por %p53, %p54
      %s56 = ssub.s32 %s22, %s34
      %s57 = ssub.s32 %s23, %s30
      %s58 = sor.u32 %s56, %s57
      %p59 = scmp.eq.s32.totalorder %s58, 0
      %s61 = sadd.s32 %s60, 1
      %s62 = scalar_select %p59, %s60, %s61
      %p65 = pneg %p59
      %p66 = scmp.eq.s32.totalorder %s15, 1
      %p67 = por %p65, %p66
      %p68 = scmp.ne.s32.totalorder %s60, %s63
      %p69 = scmp.eq.s32.totalorder %s15, 0
      %p70 = por %p68, %p69
      %p71 = scmp.ne.s32.totalorder %s60, %s63
      %p72 = scmp.eq.s32.totalorder %s20, 1
      %p73 = por %p71, %p72
      %p74 = scmp.ne.s32.totalorder %s63, %s64
      %p75 = scmp.eq.s32.totalorder %s20, 0
      %p76 = por %p74, %p75
      %p77 = scmp.ne.s32.totalorder %s63, %s64
      %p78 = scmp.eq.s32.totalorder %s21, 1
      %p79 = por %p77, %p78
      %p81 = scmp.ne.s32.totalorder %s64, %s80
      %p82 = scmp.eq.s32.totalorder %s21, 0
      %p83 = por %p81, %p82
      %s84 = ssub.s32 %s22, %s34
      %s85 = ssub.s32 %s23, %s30
      %s86 = sor.u32 %s84, %s85
      %p87 = scmp.eq.s32.totalorder %s86, 0
      %s89 = sadd.s32 %s88, 1
      %s90 = scalar_select %p87, %s88, %s89
      %p93 = pneg %p87
      %p94 = scmp.eq.s32.totalorder %s15, 1
      %p95 = por %p93, %p94
      %p96 = scmp.ne.s32.totalorder %s88, %s91
      %p97 = scmp.eq.s32.totalorder %s15, 0
      %p98 = por %p96, %p97
      %p99 = scmp.ne.s32.totalorder %s88, %s91
      %p100 = scmp.eq.s32.totalorder %s20, 1
      %p101 = por %p99, %p100
      %p102 = scmp.ne.s32.totalorder %s91, %s92
      %p103 = scmp.eq.s32.totalorder %s20, 0
      %p104 = por %p102, %p103
      %p105 = scmp.ne.s32.totalorder %s91, %s92
      %p106 = scmp.eq.s32.totalorder %s21, 1
      %p107 = por %p105, %p106
      %p109 = scmp.ne.s32.totalorder %s92, %s108
      %p110 = scmp.eq.s32.totalorder %s21, 0
      %p111 = por %p109, %p110
      %s112 = ssub.s32 %s22, %s34
      %s113 = ssub.s32 %s23, %s30
      %s114 = sor.u32 %s112, %s113
      %p115 = scmp.eq.s32.totalorder %s114, 0
      %s117 = sadd.s32 %s116, 1
      %s118 = scalar_select %p115, %s116, %s117
      %p121 = pneg %p115
      %p122 = scmp.eq.s32.totalorder %s15, 1
      %p123 = por %p121, %p122
      %p124 = scmp.ne.s32.totalorder %s116, %s119
      %p125 = scmp.eq.s32.totalorder %s15, 0
      %p126 = por %p124, %p125
      %p127 = scmp.ne.s32.totalorder %s116, %s119
      %p128 = scmp.eq.s32.totalorder %s20, 1
      %p129 = por %p127, %p128
      %p130 = scmp.ne.s32.totalorder %s119, %s120
      %p131 = scmp.eq.s32.totalorder %s20, 0
      %p132 = por %p130, %p131
      %p133 = scmp.ne.s32.totalorder %s119, %s120
      %p134 = scmp.eq.s32.totalorder %s21, 1
      %p135 = por %p133, %p134
      %p137 = scmp.ne.s32.totalorder %s120, %s136
      %p138 = scmp.eq.s32.totalorder %s21, 0
      %p139 = por %p137, %p138
      %p140 = scmp.le.s32.totalorder 1, %s15
      %p141 = scmp.lt.s32.totalorder %s15, 3
      %p142 = pnand %p140, %p141
      %p143 = pneg %p142
      // Predicated region
      $region9: #{tpu_custom_call.1} parent=5 // pred_check
        _
      $region10: #{tpu_custom_call.1} parent=5 // pred_check_branch
        %145 = sbr.rel (%p142) target = $region12
      $region11: #{tpu_custom_call.1} parent=5 // pred_region
        %s146 = ssub.s32 %s15, 1
        // Predicated region
        $region13: #{tpu_custom_call.1} parent=11 // pred_check
          %p147 = pneg %p48
        $region14: #{tpu_custom_call.1} parent=11 // pred_check_branch
          %149 = sbr.rel (%p147) target = $region16
        $region15: #{tpu_custom_call.1} parent=11 // pred_region
          _
        $region16: #{tpu_custom_call.1} parent=11 // pred_fallthru
          _
      $region12: #{tpu_custom_call.1} parent=5 // pred_fallthru
        _
      %p150 = scmp.lt.s32.totalorder %s15, 2
      // Predicated region
      $region17: #{tpu_custom_call.1} parent=5 // pred_check
        %p151 = pneg %p150
      $region18: #{tpu_custom_call.1} parent=5 // pred_check_branch
        %153 = sbr.rel (%p151) target = $region20
      $region19: #{tpu_custom_call.1} parent=5 // pred_region
        // Predicated region
        $region21: #{tpu_custom_call.1} parent=19 // pred_check
          %p154 = pneg %p70
        $region22: #{tpu_custom_call.1} parent=19 // pred_check_branch
          %156 = sbr.rel (%p154) target = $region24
        $region23: #{tpu_custom_call.1} parent=19 // pred_region
          %p157 = scmp.lt.s32.totalorder %s22, 1
          %s158 = scalar_select %p157, %s22, 1
          %p159 = scmp.lt.s32.totalorder %s23, 0
          %s160 = scalar_select %p159, %s23, 0
          %s161 = sadd.s32 %s160, %s158
          %s162 = scalar_lea.vmem %s1, %s161
        $region24: #{tpu_custom_call.1} parent=19 // pred_fallthru
          _
        // Predicated region
        $region25: #{tpu_custom_call.1} parent=19 // pred_check
          %p163 = pneg %p98
        $region26: #{tpu_custom_call.1} parent=19 // pred_check_branch
          %165 = sbr.rel (%p163) target = $region28
        $region27: #{tpu_custom_call.1} parent=19 // pred_region
          %s166 = sand.u32 %s88, 1
          %s167 = scalar_lea.sflag [#allocation3], %s166
          %s168 = sand.u32 %s88, 1
          %s169 = smul.addr %s168, 64
          %s170 = scalar_lea.vmem [#allocation2], %s169
          %s172 = ssub.s32 1024, 1024
          %173 = vsyncadd %s167, %s172
          %s174 = smul.addr %s22, 8
          %s175 = sadd.s32 %s23, %s174
          %s176 = smul.addr %s175, 128
          %s177 = scalar_lea.hbm %s2, %s176
          %s178 = sshll.u32 %s170, 4
          %s179 = int_to_ptr.vmem [resolvable:$true] %s178
          %184 = dma.hbm_to_vmem [thread:$0]  %s177, 1024, %s179, %s167, 128, 128, 8
        $region28: #{tpu_custom_call.1} parent=19 // pred_fallthru
          _
      $region20: #{tpu_custom_call.1} parent=5 // pred_fallthru
        _
      %p185 = scmp.le.s32.totalorder 1, %s15
      %p186 = scmp.lt.s32.totalorder %s15, 3
      %p187 = pnand %p185, %p186
      %p188 = pneg %p187
      // Predicated region
      $region29: #{tpu_custom_call.1} parent=5 // pred_check
        _
      $region30: #{tpu_custom_call.1} parent=5 // pred_check_branch
        %190 = sbr.rel (%p187) target = $region32
      $region31: #{tpu_custom_call.1} parent=5 // pred_region
        %s191 = ssub.s32 %s15, 1
        %s192 = sand.u32 %s91, 1
        %s193 = scalar_lea.sflag [#allocation3], %s192
        %s194 = sand.u32 %s91, 1
        %s195 = smul.addr %s194, 64
        %s196 = scalar_lea.vmem [#allocation2], %s195
        // Predicated region
        $region33: #{tpu_custom_call.1} parent=31 // pred_check
          %p197 = pneg %p104
        $region34: #{tpu_custom_call.1} parent=31 // pred_check_branch
          %199 = sbr.rel (%p197) target = $region36
        $region35: #{tpu_custom_call.1} parent=31 // pred_region
          %200 = dma.done %s193, 1024
        $region36: #{tpu_custom_call.1} parent=31 // pred_fallthru
          _
        %p201 = pneg %p48
        %p202 = pneg %p45
        %p203 = scmp.lt.s32.totalorder %s24, 1
        %s204 = scalar_select %p203, %s24, 1
        %p205 = scmp.lt.s32.totalorder %s25, 0
        %s206 = scalar_select %p205, %s25, 0
        %s207 = sadd.s32 %s206, %s204
        %s208 = scalar_lea.vmem %s1, %s207
        %p209 = pneg %p76
        %p210 = pneg %p73
        %s211 = sand.u32 %s91, 1
        %s212 = scalar_lea.sflag [#allocation3], %s211
        %s213 = sand.u32 %s91, 1
        %s214 = smul.addr %s213, 64
        %s215 = scalar_lea.vmem [#allocation2], %s214
        %p216 = pneg %p104
        %p217 = pneg %p101
        %p218 = pneg %p132
        %p219 = pneg %p129
        %s220 = sand.u32 %s119, 1
        %s221 = scalar_lea.sflag [#allocation4], %s220
        %s222 = sand.u32 %s119, 1
        %s223 = smul.addr %s222, 64
        %s224 = scalar_lea.vmem [#allocation5], %s223
        %p225 = scmp.lt.s32.totalorder %s24, 1
        %s226 = scalar_select %p225, %s24, 1
        %p227 = scmp.lt.s32.totalorder %s25, 0
        %s228 = scalar_select %p227, %s25, 0
        %s229 = sadd.s32 %s228, %s226
        %s230 = scalar_lea.vmem %s1, %s229
        %v232 = vld [vmem:[%s196] sm:$0xff]
        %v233 = vld [vmem:[%s196 + $0x8] sm:$0xff]
        %v234 = vmul.f32 %v232, %v232
        %v235 = vmul.f32 %v233, %v233
        %s236 = scalar_lea.vmem %s196, 16 [#allocation2]
        %v237 = vld [vmem:[%s236] sm:$0xff]
        %v238 = vld [vmem:[%s236 + $0x8] sm:$0xff]
        %v239 = vmul.f32 %v237, %v237
        %v240 = vmul.f32 %v238, %v238
        %v241 = vadd.f32 %v234, %v239
        %v242 = vadd.f32 %v235, %v240
        %s243 = scalar_lea.vmem %s196, 32 [#allocation2]
        %v244 = vld [vmem:[%s243] sm:$0xff]
        %v245 = vld [vmem:[%s243 + $0x8] sm:$0xff]
        %v246 = vmul.f32 %v244, %v244
        %v247 = vmul.f32 %v245, %v245
        %v248 = vadd.f32 %v241, %v246
        %v249 = vadd.f32 %v242, %v247
        %s250 = scalar_lea.vmem %s196, 48 [#allocation2]
        %v251 = vld [vmem:[%s250] sm:$0xff]
        %v252 = vld [vmem:[%s250 + $0x8] sm:$0xff]
        %v253 = vmul.f32 %v251, %v251
        %v254 = vmul.f32 %v252, %v252
        %v255 = vadd.f32 %v248, %v253
        %v256 = vadd.f32 %v249, %v254
        %v257 = vld [vmem:[%s0] sm:$0xf]
        %v258 = vld [vmem:[%s0 + $0x4] sm:$0xf]
        %v259 = vld [vmem:[%s0 + $0x8] sm:$0xf]
        %v260 = vld [vmem:[%s0 + $0xc] sm:$0xf]
        %v261 = vpack.c.bf16 %v256, %v255
        %v266 = vunpack.c.l.b16 %v257
        %v267 = vunpack.c.l.b16 %v258
        %v268 = vunpack.c.l.b16 %v259
        %v269 = vunpack.c.l.b16 %v260
        %v270 = vpack.c.b16 %v267, %v266
        %v271 = vpack.c.b16 %v269, %v268
        %vm272 = vcmask 130048
        %v274 = vsel %vm272, %v270, 0
        %v277 = vsel %vm272, %v271, 0
        %279 = vmatprep.subr.bf16.mxu0 0
        %280 = vmatpush1.bf16.msra.mxu0 0
        %281 = vmatprep.subr.bf16.mxu0 0
        %282 = vmatpush1.bf16.msra.mxu0 0
        %283 = vmatprep.subr.bf16.mxu0 0
        %284 = vmatpush1.bf16.msra.mxu0 0
        %285 = vmatprep.subr.bf16.mxu0 0
        %286 = vmatpush1.bf16.msra.mxu0 0
        %287 = vmatprep.subr.bf16.mxu0 0
        %288 = vmatpush1.bf16.msra.mxu0 0
        %289 = vmatprep.subr.bf16.mxu0 0
        %290 = vmatpush1.bf16.msra.mxu0 0
        %291 = vmatprep.subr.bf16.mxu0 0
        %292 = vmatpush1.bf16.msra.mxu0 0
        %293 = vmatprep.subr.bf16.mxu0 0
        %294 = vmatpush1.bf16.msra.mxu0 %v261
        %295 = vmatprep.subr.bf16.mxu0 0
        %296 = vmatpush2.bf16.msra.mxu0 0
        %297 = vmatprep.subr.bf16.mxu0 0
        %298 = vmatpush2.bf16.msra.mxu0 0
        %299 = vmatprep.subr.bf16.mxu0 0
        %300 = vmatpush2.bf16.msra.mxu0 0
        %301 = vmatprep.subr.bf16.mxu0 0
        %302 = vmatpush2.bf16.msra.mxu0 0
        %303 = vmatprep.subr.bf16.mxu0 0
        %304 = vmatpush2.bf16.msra.mxu0 0
        %305 = vmatprep.subr.bf16.mxu0 0
        %306 = vmatpush2.bf16.msra.mxu0 0
        %307 = vmatprep.subr.bf16.mxu0 0
        %308 = vmatpush2.bf16.msra.mxu0 0
        %309 = vmatprep.subr.bf16.mxu0 0
        %310 = vmatpush2.bf16.msra.mxu0 0
        %311 = vmatprep.mubr.bf16.mxu0 0
        %312 = vmatmul.mubr.bf16.gmra.mxu0 %v274
        %v313 = vpop.f32.mrf.mxu0
        %v314 = vadd.f32 0.0, %v313
        %v315 = vpop.f32.mrf.mxu0
        %v316 = vpop.f32.mrf.mxu0
        %v317 = vadd.f32 0.0, %v316
        %v318 = vpop.f32.mrf.mxu0
        %319 = vmatprep.mubr.bf16.mxu0 0
        %320 = vmatmul.mubr.bf16.gmra.mxu0 %v277
        %v321 = vpop.f32.mrf.mxu0
        %v322 = vadd.f32 0.0, %v321
        %v323 = vpop.f32.mrf.mxu0
        %v324 = vpop.f32.mrf.mxu0
        %v325 = vadd.f32 0.0, %v324
        %v326 = vpop.f32.mrf.mxu0
        %327 = vdwg.mxu0
        %v328 = vld [vmem:[%s230] sm:$0x1]
        %v330 = vlaneseq
        %v331 = vshrl.u32 %v330, 7
        %v332 = vsub.s32 0, %v331
        %v333 = vrot.slane %v328, %v332
        %v335 = vmul.f32 %v333, %v314
        %v336 = vmul.f32 %v333, %v317
        %v337 = vmul.f32 %v333, %v322
        %v338 = vmul.f32 %v333, %v325
        %v339 = vadd.f32 %v335, 1.0
        %v340 = vadd.f32 %v336, 1.0
        %v341 = vmul.f32 %v232, %v339
        %v342 = vmul.f32 %v233, %v340
        %v343 = vmul.f32 %v244, %v337
        %v344 = vmul.f32 %v245, %v338
        %v345 = vsub.f32 %v341, %v343
        %v346 = vsub.f32 %v342, %v344
        %347 = vst [vmem:[%s224] sm:$0xff] %v345
        %348 = vst [vmem:[%s224 + $0x8] sm:$0xff] %v346
        %v349 = vmul.f32 %v244, %v339
        %v350 = vmul.f32 %v245, %v340
        %v351 = vmul.f32 %v232, %v337
        %v352 = vmul.f32 %v233, %v338
        %v353 = vadd.f32 %v349, %v351
        %v354 = vadd.f32 %v350, %v352
        %s355 = scalar_lea.vmem %s224, 32 [#allocation5]
        %356 = vst [vmem:[%s355] sm:$0xff] %v353
        %357 = vst [vmem:[%s355 + $0x8] sm:$0xff] %v354
        %v358 = vld [vmem:[%s236] sm:$0xff]
        %v359 = vld [vmem:[%s236 + $0x8] sm:$0xff]
        %v360 = vld [vmem:[%s250] sm:$0xff]
        %v361 = vld [vmem:[%s250 + $0x8] sm:$0xff]
        %v362 = vmul.f32 %v358, %v339
        %v363 = vmul.f32 %v359, %v340
        %v364 = vmul.f32 %v360, %v337
        %v365 = vmul.f32 %v361, %v338
        %v366 = vsub.f32 %v362, %v364
        %v367 = vsub.f32 %v363, %v365
        %s368 = scalar_lea.vmem %s224, 16 [#allocation5]
        %369 = vst [vmem:[%s368] sm:$0xff] %v366
        %370 = vst [vmem:[%s368 + $0x8] sm:$0xff] %v367
        %v371 = vmul.f32 %v360, %v339
        %v372 = vmul.f32 %v361, %v340
        %v373 = vmul.f32 %v358, %v337
        %v374 = vmul.f32 %v359, %v338
        %v375 = vadd.f32 %v371, %v373
        %v376 = vadd.f32 %v372, %v374
        %s377 = scalar_lea.vmem %s224, 48 [#allocation5]
        %378 = vst [vmem:[%s377] sm:$0xff] %v375
        %379 = vst [vmem:[%s377 + $0x8] sm:$0xff] %v376
        %s380 = sand.u32 %s119, 1
        %s381 = scalar_lea.sflag [#allocation4], %s380
        %s382 = sand.u32 %s119, 1
        %s383 = smul.addr %s382, 64
        %s384 = scalar_lea.vmem [#allocation5], %s383
        // Predicated region
        $region37: #{tpu_custom_call.1} parent=31 // pred_check
          %p385 = pneg %p129
        $region38: #{tpu_custom_call.1} parent=31 // pred_check_branch
          %387 = sbr.rel (%p385) target = $region40
        $region39: #{tpu_custom_call.1} parent=31 // pred_region
          %s389 = ssub.s32 1024, 1024
          %390 = vsyncadd %s381, %s389
          %s391 = smul.addr %s24, 8
          %s392 = sadd.s32 %s25, %s391
          %s393 = smul.addr %s392, 128
          %s394 = scalar_lea.hbm %s3, %s393
          %s395 = sshll.u32 %s384, 4
          %s396 = int_to_ptr.vmem [resolvable:$true] %s395
          %401 = dma.vmem_to_hbm [thread:$0]  %s396, 1024, %s394, %s381, 128, 128, 8
        $region40: #{tpu_custom_call.1} parent=31 // pred_fallthru
          _
      $region32: #{tpu_custom_call.1} parent=5 // pred_fallthru
        _
      %p402 = scmp.le.s32.totalorder 2, %s15
      // Predicated region
      $region41: #{tpu_custom_call.1} parent=5 // pred_check
        %p403 = pneg %p402
      $region42: #{tpu_custom_call.1} parent=5 // pred_check_branch
        %405 = sbr.rel (%p403) target = $region44
      $region43: #{tpu_custom_call.1} parent=5 // pred_region
        %s406 = ssub.s32 %s15, 2
        // Predicated region
        $region45: #{tpu_custom_call.1} parent=43 // pred_check
          %p407 = pneg %p135
        $region46: #{tpu_custom_call.1} parent=43 // pred_check_branch
          %409 = sbr.rel (%p407) target = $region48
        $region47: #{tpu_custom_call.1} parent=43 // pred_region
          %s410 = sand.u32 %s120, 1
          %s411 = scalar_lea.sflag [#allocation4], %s410
          %s412 = sand.u32 %s120, 1
          %s413 = smul.addr %s412, 64
          %s414 = scalar_lea.vmem [#allocation5], %s413
          %415 = dma.done %s411, 1024
        $region48: #{tpu_custom_call.1} parent=43 // pred_fallthru
          _
      $region44: #{tpu_custom_call.1} parent=5 // pred_fallthru
        _
    $region6: #{tpu_custom_call.1} parent=1 // loop_footer
      %s19 = sadd.s32 1, %s15
    $region7: #{tpu_custom_call.1} parent=1 // loop_footer_branch
      %14 = sbr.rel target = $region3
    $region8: #{tpu_custom_call.1} parent=1 // loop_exit
      _
    %416 = vsyncpa [#allocation3], 1
    %s417 = scalar_lea.sflag [#allocation3], 1
    %418 = vsyncpa %s417, 1
    %419 = vsyncpa [#allocation4], 1
    %s420 = scalar_lea.sflag [#allocation4], 1
    %421 = vsyncpa %s420, 1

</llo_original>
